<compile_context>
chip_gen: v6e
topology: v6e:2x2x1
jax: 0.10.0
libtpu: 0.0.40
codegen_flags: <defaults>
</compile_context>

<pallas_src>
import jax
import jax.numpy as jnp
from jax.experimental import pallas as pl
from jax.experimental.pallas import tpu as pltpu

IN_FEATURES = 28 * 28
NUM_CLASSES = 10
PADDED_CLASSES = 128           # lane-dense output slab (do not widen to 256)
MAX_BATCH_TILE = 4096          # bf16 tiles: ~15 MiB total @ tb=4096
VMEM_LIMIT_BYTES = 48 << 20    # < 64 MiB (v7x physical), << 128 MiB (v5e/v6e)


def _round_up(n, m):
    return ((n + m - 1) // m) * m


def logreg_kernel(x_ref, w_ref, b_ref, o_ref):
    # x_ref: (tb, 784) bf16   w_ref: (784, 128) bf16
    # b_ref: (1, 128)  f32    o_ref: (tb, 128)  bf16
    logits = jnp.dot(x_ref[...], w_ref[...],
                     preferred_element_type=jnp.float32)        # MXU, f32 acc
    logits = logits + b_ref[...]                                # (tb, 128) f32

    # Max-stabilised log-softmax: z - (m + log(sum(exp(z - m)))).
    # Padded class lanes carry bias -1e30 -> exp underflows to 0, so the
    # denominator only sums the 10 real classes; the lane max ignores them too.
    m = jnp.max(logits, axis=1, keepdims=True)                  # (tb, 1)
    denom = jnp.sum(jnp.exp(logits - m), axis=1, keepdims=True) # (tb, 1)
    o_ref[...] = (logits - (m + jnp.log(denom))).astype(o_ref.dtype)


def logreg_forward(x, w, b, *, compute_dtype=jnp.bfloat16, out_dtype=jnp.bfloat16):
    """x: (B, 28, 28) / (B, 1, 28, 28) / (B, 784); w: (784, 10); b: (10,).

    Returns (B, 10) log-probabilities (same math as the PyTorch module).
    """
    B = x.shape[0]
    x_flat = x.reshape(B, -1)                  # same row-major order as torch .view
    assert x_flat.shape[1] == IN_FEATURES

    # Cast the dominant HBM stream to bf16; pad only to a multiple of 8 rows
    # (sublane), never to a multiple of the batch tile.  Cast + tiny pad fuse
    # into a single pass over x.
    x_in = x_flat.astype(compute_dtype)
    rows = _round_up(B, 8)
    if rows != B:
        x_in = jnp.pad(x_in, ((0, rows - B), (0, 0)))

    # Pad classes to a lane-dense 128-wide slab; padded bias lanes = -1e30.
    w_pad = jnp.zeros((IN_FEATURES, PADDED_CLASSES), compute_dtype)
    w_pad = w_pad.at[:, :NUM_CLASSES].set(w.astype(compute_dtype))
    b_pad = jnp.full((1, PADDED_CLASSES), -1e30, jnp.float32)
    b_pad = b_pad.at[0, :NUM_CLASSES].set(b.astype(jnp.float32))

    # Batch tile: as large as allowed, but keep >=2 grid steps when the batch
    # permits so v7x's two TensorCores both get work (v5e/v6e are single-TC).
    tb = min(MAX_BATCH_TILE, rows)
    if rows > 8:
        tb = min(tb, _round_up(pl.cdiv(rows, 2), 8))
    grid = (pl.cdiv(rows, tb),)                # ragged last block handled by Pallas

    out = pl.pallas_call(
        logreg_kernel,
        out_shape=jax.ShapeDtypeStruct((rows, PADDED_CLASSES), out_dtype),
        grid=grid,
        in_specs=[
            pl.BlockSpec((tb, IN_FEATURES), lambda i: (i, 0)),              # x: streamed
            pl.BlockSpec((IN_FEATURES, PADDED_CLASSES), lambda i: (0, 0)),  # w: resident
            pl.BlockSpec((1, PADDED_CLASSES), lambda i: (0, 0)),            # b: resident
        ],
        out_specs=pl.BlockSpec((tb, PADDED_CLASSES), lambda i: (i, 0)),
        compiler_params=pltpu.CompilerParams(
            dimension_semantics=("parallel",),
            vmem_limit_bytes=VMEM_LIMIT_BYTES,
        ),
    )(x_in, w_pad, b_pad)

    # Rows >= B (if any) are padding / ragged-block garbage; drop them here.
    return out[:B, :NUM_CLASSES]


def init_params(key):
    # Mirrors get_weights: randn(dims) / dims[0]
    kw, kb = jax.random.split(key)
    w = jax.random.normal(kw, (IN_FEATURES, NUM_CLASSES), jnp.float32) / IN_FEATURES
    b = jax.random.normal(kb, (NUM_CLASSES,), jnp.float32) / NUM_CLASSES
    return w, b


if __name__ == "__main__":
    key = jax.random.PRNGKey(0)
    k_x, k_p = jax.random.split(key)

    B = 2
    x = jax.random.normal(k_x, (B, 28, 28), jnp.float32)
    w, b = init_params(k_p)

    fwd = jax.jit(logreg_forward)
    out = fwd(x, w, b)
    out = jax.block_until_ready(out)

    # Sanity check against plain-JAX f32 reference of the exact PyTorch math.
    # Tolerance accounts for bf16 activations/weights/output (f32 accumulate).
    x_flat = x.reshape(B, -1)
    logits = x_flat @ w + b
    ref = jnp.log(jnp.exp(logits) / jnp.exp(logits).sum(axis=1, keepdims=True))
    assert out.shape == (B, NUM_CLASSES)
    assert jnp.allclose(out.astype(jnp.float32), ref, atol=2e-2, rtol=2e-2)

    print("KERNEL_OK")
</pallas_src>

<mosaic_0001>
module attributes {stable_mosaic.version = 11 : i64} {
  func.func @logreg_kernel(%arg0: i32, %arg1: memref<8x784xbf16, #tpu.memory_space<vmem>>, %arg2: memref<784x128xbf16, #tpu.memory_space<vmem>>, %arg3: memref<1x128xf32, #tpu.memory_space<vmem>>, %arg4: memref<8x128xbf16, #tpu.memory_space<vmem>>) attributes {dimension_semantics = [#tpu.dimension_semantics<parallel>], iteration_bounds = array<i64: 1>, scalar_prefetch = 0 : i64, scratch_operands = 0 : i64, tpu.core_type = #tpu.core_type<tc>, window_params = [{transform_indices = @transform_0, window_bounds = array<i64: 8, 784>}, {pipeline_mode = #tpu.pipeline_mode<synchronous>, transform_indices = @transform_1, window_bounds = array<i64: 784, 128>}, {pipeline_mode = #tpu.pipeline_mode<synchronous>, transform_indices = @transform_2, window_bounds = array<i64: 1, 128>}, {transform_indices = @transform_3, window_bounds = array<i64: 8, 128>}]} {
    %c0 = arith.constant 0 : index
    %c0_0 = arith.constant 0 : index
    %0 = vector.load %arg1[%c0, %c0_0] : memref<8x784xbf16, #tpu.memory_space<vmem>>, vector<8x784xbf16>
    %c0_1 = arith.constant 0 : index
    %c0_2 = arith.constant 0 : index
    %1 = vector.load %arg2[%c0_1, %c0_2] : memref<784x128xbf16, #tpu.memory_space<vmem>>, vector<784x128xbf16>
    %cst = arith.constant dense<0.000000e+00> : vector<8x128xf32>
    %2 = tpu.matmul %0, %1, %cst {dimension_numbers = #tpu.dot_dimension_numbers<[1], [0], [0], [1], [0, 0, 1, 1], [], []>} : vector<8x784xbf16>, vector<784x128xbf16>, vector<8x128xf32> -> vector<8x128xf32>
    %c0_3 = arith.constant 0 : index
    %c0_4 = arith.constant 0 : index
    %3 = vector.load %arg3[%c0_3, %c0_4] : memref<1x128xf32, #tpu.memory_space<vmem>>, vector<1x128xf32>
    %4 = vector.broadcast %3 : vector<1x128xf32> to vector<8x128xf32>
    %5 = arith.addf %2, %4 : vector<8x128xf32>
    %cst_5 = arith.constant dense<0xFF800000> : vector<8xf32>
    %6 = vector.multi_reduction <maximumf>, %5, %cst_5 [1] : vector<8x128xf32> to vector<8xf32>
    %7 = vector.shape_cast %6 : vector<8xf32> to vector<8x1xf32>
    %8 = vector.broadcast %7 : vector<8x1xf32> to vector<8x128xf32>
    %9 = arith.subf %5, %8 : vector<8x128xf32>
    %10 = math.exp %9 : vector<8x128xf32>
    %cst_6 = arith.constant dense<0.000000e+00> : vector<8xf32>
    %11 = vector.multi_reduction <add>, %10, %cst_6 [1] : vector<8x128xf32> to vector<8xf32>
    %12 = vector.shape_cast %11 : vector<8xf32> to vector<8x1xf32>
    %13 = math.log %12 : vector<8x1xf32>
    %14 = arith.addf %7, %13 : vector<8x1xf32>
    %15 = vector.broadcast %14 : vector<8x1xf32> to vector<8x128xf32>
    %16 = arith.subf %5, %15 : vector<8x128xf32>
    %17 = arith.truncf %16 : vector<8x128xf32> to vector<8x128xbf16>
    %c0_7 = arith.constant 0 : index
    %c0_8 = arith.constant 0 : index
    %18 = vector.load %arg4[%c0_7, %c0_8] : memref<8x128xbf16, #tpu.memory_space<vmem>>, vector<8x128xbf16>
    tpu.vector_store %arg4[%c0_7, %c0_8], %17 {strides = array<i32>} : memref<8x128xbf16, #tpu.memory_space<vmem>>, vector<8x128xbf16>,
    return
  }
  func.func @transform_0(%arg0: i32) -> (i32, i32) {
    %c0_i32 = arith.constant 0 : i32
    %c0_i32_0 = arith.constant 0 : i32
    return %arg0, %c0_i32 : i32, i32
  }
  func.func @transform_1(%arg0: i32) -> (i32, i32) {
    %c0_i32 = arith.constant 0 : i32
    %c0_i32_0 = arith.constant 0 : i32
    %c0_i32_1 = arith.constant 0 : i32
    return %c0_i32, %c0_i32_0 : i32, i32
  }
  func.func @transform_2(%arg0: i32) -> (i32, i32) {
    %c0_i32 = arith.constant 0 : i32
    %c0_i32_0 = arith.constant 0 : i32
    %c0_i32_1 = arith.constant 0 : i32
    return %c0_i32, %c0_i32_0 : i32, i32
  }
  func.func @transform_3(%arg0: i32) -> (i32, i32) {
    %c0_i32 = arith.constant 0 : i32
    %c0_i32_0 = arith.constant 0 : i32
    return %arg0, %c0_i32 : i32, i32
  }
}

</mosaic_0001>

<llo_original>
// kernel: logreg_forward.1
$region0: #{logreg_forward.1}
  #allocation0 [shape = 'u32[]', space=smem, size = 0x4, offset = 0x4, fixed_abs, tag = 'smem constant byte address 0x4 - core index']
  #allocation1 [shape = 'u32[144,128]{1,0:T(1,128)}', space=vmem, size = 0x12000, scoped, tag = 'internal scratch']
  %s0 = inlined_call_operand.vmem [shape: bf16[8,784], index: 0, kind: input, shape index: {}]
  %s1 = inlined_call_operand.vmem [shape: bf16[784,128], index: 1, kind: input, shape index: {}]
  %s2 = inlined_call_operand.vmem [shape: f32[1,128], index: 2, kind: input, shape index: {}]
  %s3 = inlined_call_operand.vmem [shape: bf16[8,128], index: 3, kind: output, shape index: {}]
  %s4 = sld [smem:[#allocation0]]
  $region22: #{logreg_forward.1} parent=0
    _
  %s6 = ssub.s32 1, %s4
  %s7 = scalar_select 0, %s6, %s4
  // Predicated region
  $region2: #{logreg_forward.1} parent=0 // pred_check
    _
  $region3: #{logreg_forward.1} parent=0 // pred_check_branch
    %9 = sbr.rel (0) target = $region5
  $region4: #{logreg_forward.1} parent=0 // pred_region
    _
  $region5: #{logreg_forward.1} parent=0 // pred_fallthru
    _
  // Predicated region
  $region6: #{logreg_forward.1} parent=0 // pred_check
    _
  $region7: #{logreg_forward.1} parent=0 // pred_check_branch
    %11 = sbr.rel (0) target = $region9
  $region8: #{logreg_forward.1} parent=0 // pred_region
    _
  $region9: #{logreg_forward.1} parent=0 // pred_fallthru
    _
  // Predicated region
  $region10: #{logreg_forward.1} parent=0 // pred_check
    _
  $region11: #{logreg_forward.1} parent=0 // pred_check_branch
    %13 = sbr.rel (0) target = $region13
  $region12: #{logreg_forward.1} parent=0 // pred_region
    _
  $region13: #{logreg_forward.1} parent=0 // pred_fallthru
    _
  %v15 = vld [vmem:[%s0] sm:$0xff]
  %v16 = vld [vmem:[%s0 + $0x8] sm:$0xff]
  %v17 = vld [vmem:[%s0 + $0x10] sm:$0xff]
  %v18 = vld [vmem:[%s0 + $0x18] sm:$0xf]
  %v19 = vld [vmem:[%s1] sm:$0xf]
  %v20 = vld [vmem:[%s1 + $0x4] sm:$0xf]
  %v21 = vld [vmem:[%s1 + $0x8] sm:$0xf]
  %v22 = vld [vmem:[%s1 + $0xc] sm:$0xf]
  %v23 = vld [vmem:[%s1 + $0x10] sm:$0xf]
  %v24 = vld [vmem:[%s1 + $0x14] sm:$0xf]
  %v25 = vld [vmem:[%s1 + $0x18] sm:$0xf]
  %v26 = vld [vmem:[%s1 + $0x1c] sm:$0xf]
  %v27 = vld [vmem:[%s1 + $0x20] sm:$0xf]
  %v28 = vld [vmem:[%s1 + $0x24] sm:$0xf]
  %v29 = vld [vmem:[%s1 + $0x28] sm:$0xf]
  %v30 = vld [vmem:[%s1 + $0x2c] sm:$0xf]
  %v31 = vld [vmem:[%s1 + $0x30] sm:$0xf]
  %v32 = vld [vmem:[%s1 + $0x34] sm:$0xf]
  %v33 = vld [vmem:[%s1 + $0x38] sm:$0xf]
  %v34 = vld [vmem:[%s1 + $0x3c] sm:$0xf]
  %v35 = vld [vmem:[%s1 + $0x40] sm:$0xf]
  %v36 = vld [vmem:[%s1 + $0x44] sm:$0xf]
  %v37 = vld [vmem:[%s1 + $0x48] sm:$0xf]
  %v38 = vld [vmem:[%s1 + $0x4c] sm:$0xf]
  %v39 = vld [vmem:[%s1 + $0x50] sm:$0xf]
  %v40 = vld [vmem:[%s1 + $0x54] sm:$0xf]
  %v41 = vld [vmem:[%s1 + $0x58] sm:$0xf]
  %v42 = vld [vmem:[%s1 + $0x5c] sm:$0xf]
  %v43 = vld [vmem:[%s1 + $0x60] sm:$0xf]
  %v44 = vld [vmem:[%s1 + $0x64] sm:$0xf]
  %v45 = vld [vmem:[%s1 + $0x68] sm:$0xf]
  %v46 = vld [vmem:[%s1 + $0x6c] sm:$0xf]
  %v47 = vld [vmem:[%s1 + $0x70] sm:$0xf]
  %v48 = vld [vmem:[%s1 + $0x74] sm:$0xf]
  %v49 = vld [vmem:[%s1 + $0x78] sm:$0xf]
  %v50 = vld [vmem:[%s1 + $0x7c] sm:$0xf]
  %v51 = vld [vmem:[%s1 + $0x80] sm:$0xf]
  %v52 = vld [vmem:[%s1 + $0x84] sm:$0xf]
  %v53 = vld [vmem:[%s1 + $0x88] sm:$0xf]
  %v54 = vld [vmem:[%s1 + $0x8c] sm:$0xf]
  %v55 = vld [vmem:[%s1 + $0x90] sm:$0xf]
  %v56 = vld [vmem:[%s1 + $0x94] sm:$0xf]
  %v57 = vld [vmem:[%s1 + $0x98] sm:$0xf]
  %v58 = vld [vmem:[%s1 + $0x9c] sm:$0xf]
  %v59 = vld [vmem:[%s1 + $0xa0] sm:$0xf]
  %v60 = vld [vmem:[%s1 + $0xa4] sm:$0xf]
  %v61 = vld [vmem:[%s1 + $0xa8] sm:$0xf]
  %v62 = vld [vmem:[%s1 + $0xac] sm:$0xf]
  %v63 = vld [vmem:[%s1 + $0xb0] sm:$0xf]
  %v64 = vld [vmem:[%s1 + $0xb4] sm:$0xf]
  %v65 = vld [vmem:[%s1 + $0xb8] sm:$0xf]
  %v66 = vld [vmem:[%s1 + $0xbc] sm:$0xf]
  %v67 = vld [vmem:[%s1 + $0xc0] sm:$0xf]
  %v68 = vld [vmem:[%s1 + $0xc4] sm:$0xf]
  %v69 = vld [vmem:[%s1 + $0xc8] sm:$0xf]
  %v70 = vld [vmem:[%s1 + $0xcc] sm:$0xf]
  %v71 = vld [vmem:[%s1 + $0xd0] sm:$0xf]
  %v72 = vld [vmem:[%s1 + $0xd4] sm:$0xf]
  %v73 = vld [vmem:[%s1 + $0xd8] sm:$0xf]
  %v74 = vld [vmem:[%s1 + $0xdc] sm:$0xf]
  %v75 = vld [vmem:[%s1 + $0xe0] sm:$0xf]
  %v76 = vld [vmem:[%s1 + $0xe4] sm:$0xf]
  %v77 = vld [vmem:[%s1 + $0xe8] sm:$0xf]
  %v78 = vld [vmem:[%s1 + $0xec] sm:$0xf]
  %v79 = vld [vmem:[%s1 + $0xf0] sm:$0xf]
  %v80 = vld [vmem:[%s1 + $0xf4] sm:$0xf]
  %v81 = vld [vmem:[%s1 + $0xf8] sm:$0xf]
  %v82 = vld [vmem:[%s1 + $0xfc] sm:$0xf]
  %v83 = vld [vmem:[%s1 + $0x100] sm:$0xf]
  %v84 = vld [vmem:[%s1 + $0x104] sm:$0xf]
  %v85 = vld [vmem:[%s1 + $0x108] sm:$0xf]
  %v86 = vld [vmem:[%s1 + $0x10c] sm:$0xf]
  %v87 = vld [vmem:[%s1 + $0x110] sm:$0xf]
  %v88 = vld [vmem:[%s1 + $0x114] sm:$0xf]
  %v89 = vld [vmem:[%s1 + $0x118] sm:$0xf]
  %v90 = vld [vmem:[%s1 + $0x11c] sm:$0xf]
  %v91 = vld [vmem:[%s1 + $0x120] sm:$0xf]
  %v92 = vld [vmem:[%s1 + $0x124] sm:$0xf]
  %v93 = vld [vmem:[%s1 + $0x128] sm:$0xf]
  %v94 = vld [vmem:[%s1 + $0x12c] sm:$0xf]
  %v95 = vld [vmem:[%s1 + $0x130] sm:$0xf]
  %v96 = vld [vmem:[%s1 + $0x134] sm:$0xf]
  %v97 = vld [vmem:[%s1 + $0x138] sm:$0xf]
  %v98 = vld [vmem:[%s1 + $0x13c] sm:$0xf]
  %v99 = vld [vmem:[%s1 + $0x140] sm:$0xf]
  %v100 = vld [vmem:[%s1 + $0x144] sm:$0xf]
  %v101 = vld [vmem:[%s1 + $0x148] sm:$0xf]
  %v102 = vld [vmem:[%s1 + $0x14c] sm:$0xf]
  %v103 = vld [vmem:[%s1 + $0x150] sm:$0xf]
  %v104 = vld [vmem:[%s1 + $0x154] sm:$0xf]
  %v105 = vld [vmem:[%s1 + $0x158] sm:$0xf]
  %v106 = vld [vmem:[%s1 + $0x15c] sm:$0xf]
  %v107 = vld [vmem:[%s1 + $0x160] sm:$0xf]
  %v108 = vld [vmem:[%s1 + $0x164] sm:$0xf]
  %v109 = vld [vmem:[%s1 + $0x168] sm:$0xf]
  %v110 = vld [vmem:[%s1 + $0x16c] sm:$0xf]
  %v111 = vld [vmem:[%s1 + $0x170] sm:$0xf]
  %v112 = vld [vmem:[%s1 + $0x174] sm:$0xf]
  %v113 = vld [vmem:[%s1 + $0x178] sm:$0xf]
  %v114 = vld [vmem:[%s1 + $0x17c] sm:$0xf]
  %v115 = vld [vmem:[%s1 + $0x180] sm:$0xf]
  %v116 = vld [vmem:[%s1 + $0x184] sm:$0xf]
  %v117 = vld [vmem:[%s2] sm:$0x1]
  %v119 = vlaneseq
  %v120 = vshrl.u32 %v119, 7
  %v121 = vsub.s32 0, %v120
  %v122 = vrot.slane %v117, %v121
  %v128 = vunpack.c.l.b16 %v15
  %v129 = vunpack.c.h.b16 %v15
  %v130 = vunpack.c.l.b16 %v16
  %v131 = vunpack.c.h.b16 %v16
  %v132 = vunpack.c.l.b16 %v17
  %v133 = vunpack.c.h.b16 %v17
  %v134 = vunpack.c.l.b16 %v18
  %v135 = vpack.c.b16 %v128, %v128
  %v136 = vpack.c.b16 %v129, %v129
  %v137 = vpack.c.b16 %v130, %v130
  %v138 = vpack.c.b16 %v131, %v131
  %v139 = vpack.c.b16 %v132, %v132
  %v140 = vpack.c.b16 %v133, %v133
  %v141 = vpack.c.b16 %v134, %v134
  %v246 = vunpack.c.l.b16 %v19
  %v247 = vunpack.c.l.b16 %v20
  %v248 = vunpack.c.l.b16 %v21
  %v249 = vunpack.c.l.b16 %v22
  %v250 = vunpack.c.l.b16 %v23
  %v251 = vunpack.c.l.b16 %v24
  %v252 = vunpack.c.l.b16 %v25
  %v253 = vunpack.c.l.b16 %v26
  %v254 = vunpack.c.l.b16 %v27
  %v255 = vunpack.c.l.b16 %v28
  %v256 = vunpack.c.l.b16 %v29
  %v257 = vunpack.c.l.b16 %v30
  %v258 = vunpack.c.l.b16 %v31
  %v259 = vunpack.c.l.b16 %v32
  %v260 = vunpack.c.l.b16 %v33
  %v261 = vunpack.c.l.b16 %v34
  %v262 = vunpack.c.l.b16 %v35
  %v263 = vunpack.c.l.b16 %v36
  %v264 = vunpack.c.l.b16 %v37
  %v265 = vunpack.c.l.b16 %v38
  %v266 = vunpack.c.l.b16 %v39
  %v267 = vunpack.c.l.b16 %v40
  %v268 = vunpack.c.l.b16 %v41
  %v269 = vunpack.c.l.b16 %v42
  %v270 = vunpack.c.l.b16 %v43
  %v271 = vunpack.c.l.b16 %v44
  %v272 = vunpack.c.l.b16 %v45
  %v273 = vunpack.c.l.b16 %v46
  %v274 = vunpack.c.l.b16 %v47
  %v275 = vunpack.c.l.b16 %v48
  %v276 = vunpack.c.l.b16 %v49
  %v277 = vunpack.c.l.b16 %v50
  %v278 = vunpack.c.l.b16 %v51
  %v279 = vunpack.c.l.b16 %v52
  %v280 = vunpack.c.l.b16 %v53
  %v281 = vunpack.c.l.b16 %v54
  %v282 = vunpack.c.l.b16 %v55
  %v283 = vunpack.c.l.b16 %v56
  %v284 = vunpack.c.l.b16 %v57
  %v285 = vunpack.c.l.b16 %v58
  %v286 = vunpack.c.l.b16 %v59
  %v287 = vunpack.c.l.b16 %v60
  %v288 = vunpack.c.l.b16 %v61
  %v289 = vunpack.c.l.b16 %v62
  %v290 = vunpack.c.l.b16 %v63
  %v291 = vunpack.c.l.b16 %v64
  %v292 = vunpack.c.l.b16 %v65
  %v293 = vunpack.c.l.b16 %v66
  %v294 = vunpack.c.l.b16 %v67
  %v295 = vunpack.c.l.b16 %v68
  %v296 = vunpack.c.l.b16 %v69
  %v297 = vunpack.c.l.b16 %v70
  %v298 = vunpack.c.l.b16 %v71
  %v299 = vunpack.c.l.b16 %v72
  %v300 = vunpack.c.l.b16 %v73
  %v301 = vunpack.c.l.b16 %v74
  %v302 = vunpack.c.l.b16 %v75
  %v303 = vunpack.c.l.b16 %v76
  %v304 = vunpack.c.l.b16 %v77
  %v305 = vunpack.c.l.b16 %v78
  %v306 = vunpack.c.l.b16 %v79
  %v307 = vunpack.c.l.b16 %v80
  %v308 = vunpack.c.l.b16 %v81
  %v309 = vunpack.c.l.b16 %v82
  %v310 = vunpack.c.l.b16 %v83
  %v311 = vunpack.c.l.b16 %v84
  %v312 = vunpack.c.l.b16 %v85
  %v313 = vunpack.c.l.b16 %v86
  %v314 = vunpack.c.l.b16 %v87
  %v315 = vunpack.c.l.b16 %v88
  %v316 = vunpack.c.l.b16 %v89
  %v317 = vunpack.c.l.b16 %v90
  %v318 = vunpack.c.l.b16 %v91
  %v319 = vunpack.c.l.b16 %v92
  %v320 = vunpack.c.l.b16 %v93
  %v321 = vunpack.c.l.b16 %v94
  %v322 = vunpack.c.l.b16 %v95
  %v323 = vunpack.c.l.b16 %v96
  %v324 = vunpack.c.l.b16 %v97
  %v325 = vunpack.c.l.b16 %v98
  %v326 = vunpack.c.l.b16 %v99
  %v327 = vunpack.c.l.b16 %v100
  %v328 = vunpack.c.l.b16 %v101
  %v329 = vunpack.c.l.b16 %v102
  %v330 = vunpack.c.l.b16 %v103
  %v331 = vunpack.c.l.b16 %v104
  %v332 = vunpack.c.l.b16 %v105
  %v333 = vunpack.c.l.b16 %v106
  %v334 = vunpack.c.l.b16 %v107
  %v335 = vunpack.c.l.b16 %v108
  %v336 = vunpack.c.l.b16 %v109
  %v337 = vunpack.c.l.b16 %v110
  %v338 = vunpack.c.l.b16 %v111
  %v339 = vunpack.c.l.b16 %v112
  %v340 = vunpack.c.l.b16 %v113
  %v341 = vunpack.c.l.b16 %v114
  %v342 = vunpack.c.l.b16 %v115
  %v343 = vunpack.c.l.b16 %v116
  %v344 = vpack.c.b16 %v247, %v246
  %v345 = vpack.c.b16 %v249, %v248
  %v346 = vpack.c.b16 %v251, %v250
  %v347 = vpack.c.b16 %v253, %v252
  %v348 = vpack.c.b16 %v255, %v254
  %v349 = vpack.c.b16 %v257, %v256
  %v350 = vpack.c.b16 %v259, %v258
  %v351 = vpack.c.b16 %v261, %v260
  %v352 = vpack.c.b16 %v263, %v262
  %v353 = vpack.c.b16 %v265, %v264
  %v354 = vpack.c.b16 %v267, %v266
  %v355 = vpack.c.b16 %v269, %v268
  %v356 = vpack.c.b16 %v271, %v270
  %v357 = vpack.c.b16 %v273, %v272
  %v358 = vpack.c.b16 %v275, %v274
  %v359 = vpack.c.b16 %v277, %v276
  %v360 = vpack.c.b16 %v279, %v278
  %v361 = vpack.c.b16 %v281, %v280
  %v362 = vpack.c.b16 %v283, %v282
  %v363 = vpack.c.b16 %v285, %v284
  %v364 = vpack.c.b16 %v287, %v286
  %v365 = vpack.c.b16 %v289, %v288
  %v366 = vpack.c.b16 %v291, %v290
  %v367 = vpack.c.b16 %v293, %v292
  %v368 = vpack.c.b16 %v295, %v294
  %v369 = vpack.c.b16 %v297, %v296
  %v370 = vpack.c.b16 %v299, %v298
  %v371 = vpack.c.b16 %v301, %v300
  %v372 = vpack.c.b16 %v303, %v302
  %v373 = vpack.c.b16 %v305, %v304
  %v374 = vpack.c.b16 %v307, %v306
  %v375 = vpack.c.b16 %v309, %v308
  %v376 = vpack.c.b16 %v311, %v310
  %v377 = vpack.c.b16 %v313, %v312
  %v378 = vpack.c.b16 %v315, %v314
  %v379 = vpack.c.b16 %v317, %v316
  %v380 = vpack.c.b16 %v319, %v318
  %v381 = vpack.c.b16 %v321, %v320
  %v382 = vpack.c.b16 %v323, %v322
  %v383 = vpack.c.b16 %v325, %v324
  %v384 = vpack.c.b16 %v327, %v326
  %v385 = vpack.c.b16 %v329, %v328
  %v386 = vpack.c.b16 %v331, %v330
  %v387 = vpack.c.b16 %v333, %v332
  %v388 = vpack.c.b16 %v335, %v334
  %v389 = vpack.c.b16 %v337, %v336
  %v390 = vpack.c.b16 %v339, %v338
  %v391 = vpack.c.b16 %v341, %v340
  %v392 = vpack.c.b16 %v343, %v342
  %vm442 = vcmask 130048
  %v444 = vsel %vm442, %v141, 0
  %446 = vmatprep.subr.bf16.mxu0 0
  %447 = vmatpush1.bf16.msra.mxu0 %v351
  %448 = vmatprep.subr.bf16.mxu0 0
  %449 = vmatpush1.bf16.msra.mxu0 %v350
  %450 = vmatprep.subr.bf16.mxu0 0
  %451 = vmatpush1.bf16.msra.mxu0 %v349
  %452 = vmatprep.subr.bf16.mxu0 0
  %453 = vmatpush1.bf16.msra.mxu0 %v348
  %454 = vmatprep.subr.bf16.mxu0 0
  %455 = vmatpush1.bf16.msra.mxu0 %v347
  %456 = vmatprep.subr.bf16.mxu0 0
  %457 = vmatpush1.bf16.msra.mxu0 %v346
  %458 = vmatprep.subr.bf16.mxu0 0
  %459 = vmatpush1.bf16.msra.mxu0 %v345
  %460 = vmatprep.subr.bf16.mxu0 0
  %461 = vmatpush1.bf16.msra.mxu0 %v344
  %462 = vmatprep.subr.bf16.mxu0 0
  %463 = vmatpush2.bf16.msra.mxu0 %v359
  %464 = vmatprep.subr.bf16.mxu0 0
  %465 = vmatpush2.bf16.msra.mxu0 %v358
  %466 = vmatprep.subr.bf16.mxu0 0
  %467 = vmatpush2.bf16.msra.mxu0 %v357
  %468 = vmatprep.subr.bf16.mxu0 0
  %469 = vmatpush2.bf16.msra.mxu0 %v356
  %470 = vmatprep.subr.bf16.mxu0 0
  %471 = vmatpush2.bf16.msra.mxu0 %v355
  %472 = vmatprep.subr.bf16.mxu0 0
  %473 = vmatpush2.bf16.msra.mxu0 %v354
  %474 = vmatprep.subr.bf16.mxu0 0
  %475 = vmatpush2.bf16.msra.mxu0 %v353
  %476 = vmatprep.subr.bf16.mxu0 0
  %477 = vmatpush2.bf16.msra.mxu0 %v352
  %478 = vmatprep.mubr.bf16.mxu0 %v136
  %479 = vmatmul.mubr.bf16.gmra.mxu0 %v135
  %v480 = vpop.f32.mrf.mxu0
  %v481 = vadd.f32 %v122, %v480
  %v482 = vpop.f32.mrf.mxu0
  %v483 = vpop.f32.mrf.mxu0
  %v484 = vpop.f32.mrf.mxu0
  %485 = vdwg.mxu0
  %486 = vmatprep.subr.bf16.mxu0 0
  %487 = vmatpush1.bf16.msra.mxu0 %v367
  %488 = vmatprep.subr.bf16.mxu0 0
  %489 = vmatpush1.bf16.msra.mxu0 %v366
  %490 = vmatprep.subr.bf16.mxu0 0
  %491 = vmatpush1.bf16.msra.mxu0 %v365
  %492 = vmatprep.subr.bf16.mxu0 0
  %493 = vmatpush1.bf16.msra.mxu0 %v364
  %494 = vmatprep.subr.bf16.mxu0 0
  %495 = vmatpush1.bf16.msra.mxu0 %v363
  %496 = vmatprep.subr.bf16.mxu0 0
  %497 = vmatpush1.bf16.msra.mxu0 %v362
  %498 = vmatprep.subr.bf16.mxu0 0
  %499 = vmatpush1.bf16.msra.mxu0 %v361
  %500 = vmatprep.subr.bf16.mxu0 0
  %501 = vmatpush1.bf16.msra.mxu0 %v360
  %502 = vmatprep.subr.bf16.mxu0 0
  %503 = vmatpush2.bf16.msra.mxu0 %v375
  %504 = vmatprep.subr.bf16.mxu0 0
  %505 = vmatpush2.bf16.msra.mxu0 %v374
  %506 = vmatprep.subr.bf16.mxu0 0
  %507 = vmatpush2.bf16.msra.mxu0 %v373
  %508 = vmatprep.subr.bf16.mxu0 0
  %509 = vmatpush2.bf16.msra.mxu0 %v372
  %510 = vmatprep.subr.bf16.mxu0 0
  %511 = vmatpush2.bf16.msra.mxu0 %v371
  %512 = vmatprep.subr.bf16.mxu0 0
  %513 = vmatpush2.bf16.msra.mxu0 %v370
  %514 = vmatprep.subr.bf16.mxu0 0
  %515 = vmatpush2.bf16.msra.mxu0 %v369
  %516 = vmatprep.subr.bf16.mxu0 0
  %517 = vmatpush2.bf16.msra.mxu0 %v368
  %518 = vmatprep.mubr.bf16.mxu0 %v138
  %519 = vmatmul.mubr.bf16.gmra.mxu0 %v137
  %v520 = vpop.f32.mrf.mxu0
  %v521 = vadd.f32 %v481, %v520
  %v522 = vpop.f32.mrf.mxu0
  %v523 = vpop.f32.mrf.mxu0
  %v524 = vpop.f32.mrf.mxu0
  %525 = vdwg.mxu0
  %526 = vmatprep.subr.bf16.mxu0 0
  %527 = vmatpush1.bf16.msra.mxu0 %v383
  %528 = vmatprep.subr.bf16.mxu0 0
  %529 = vmatpush1.bf16.msra.mxu0 %v382
  %530 = vmatprep.subr.bf16.mxu0 0
  %531 = vmatpush1.bf16.msra.mxu0 %v381
  %532 = vmatprep.subr.bf16.mxu0 0
  %533 = vmatpush1.bf16.msra.mxu0 %v380
  %534 = vmatprep.subr.bf16.mxu0 0
  %535 = vmatpush1.bf16.msra.mxu0 %v379
  %536 = vmatprep.subr.bf16.mxu0 0
  %537 = vmatpush1.bf16.msra.mxu0 %v378
  %538 = vmatprep.subr.bf16.mxu0 0
  %539 = vmatpush1.bf16.msra.mxu0 %v377
  %540 = vmatprep.subr.bf16.mxu0 0
  %541 = vmatpush1.bf16.msra.mxu0 %v376
  %542 = vmatprep.subr.bf16.mxu0 0
  %543 = vmatpush2.bf16.msra.mxu0 %v391
  %544 = vmatprep.subr.bf16.mxu0 0
  %545 = vmatpush2.bf16.msra.mxu0 %v390
  %546 = vmatprep.subr.bf16.mxu0 0
  %547 = vmatpush2.bf16.msra.mxu0 %v389
  %548 = vmatprep.subr.bf16.mxu0 0
  %549 = vmatpush2.bf16.msra.mxu0 %v388
  %550 = vmatprep.subr.bf16.mxu0 0
  %551 = vmatpush2.bf16.msra.mxu0 %v387
  %552 = vmatprep.subr.bf16.mxu0 0
  %553 = vmatpush2.bf16.msra.mxu0 %v386
  %554 = vmatprep.subr.bf16.mxu0 0
  %555 = vmatpush2.bf16.msra.mxu0 %v385
  %556 = vmatprep.subr.bf16.mxu0 0
  %557 = vmatpush2.bf16.msra.mxu0 %v384
  %558 = vmatprep.mubr.bf16.mxu0 %v140
  %559 = vmatmul.mubr.bf16.gmra.mxu0 %v139
  %v560 = vpop.f32.mrf.mxu0
  %v561 = vadd.f32 %v521, %v560
  %v562 = vpop.f32.mrf.mxu0
  %v563 = vpop.f32.mrf.mxu0
  %v564 = vpop.f32.mrf.mxu0
  %565 = vdwg.mxu0
  %566 = vmatprep.subr.bf16.mxu0 0
  %567 = vmatpush1.bf16.msra.mxu0 0
  %568 = vmatprep.subr.bf16.mxu0 0
  %569 = vmatpush1.bf16.msra.mxu0 0
  %570 = vmatprep.subr.bf16.mxu0 0
  %571 = vmatpush1.bf16.msra.mxu0 0
  %572 = vmatprep.subr.bf16.mxu0 0
  %573 = vmatpush1.bf16.msra.mxu0 0
  %574 = vmatprep.subr.bf16.mxu0 0
  %575 = vmatpush1.bf16.msra.mxu0 0
  %576 = vmatprep.subr.bf16.mxu0 0
  %577 = vmatpush1.bf16.msra.mxu0 0
  %578 = vmatprep.subr.bf16.mxu0 0
  %579 = vmatpush1.bf16.msra.mxu0 0
  %580 = vmatprep.subr.bf16.mxu0 0
  %581 = vmatpush1.bf16.msra.mxu0 %v392
  %582 = vmatprep.subr.bf16.mxu0 0
  %583 = vmatpush2.bf16.msra.mxu0 0
  %584 = vmatprep.subr.bf16.mxu0 0
  %585 = vmatpush2.bf16.msra.mxu0 0
  %586 = vmatprep.subr.bf16.mxu0 0
  %587 = vmatpush2.bf16.msra.mxu0 0
  %588 = vmatprep.subr.bf16.mxu0 0
  %589 = vmatpush2.bf16.msra.mxu0 0
  %590 = vmatprep.subr.bf16.mxu0 0
  %591 = vmatpush2.bf16.msra.mxu0 0
  %592 = vmatprep.subr.bf16.mxu0 0
  %593 = vmatpush2.bf16.msra.mxu0 0
  %594 = vmatprep.subr.bf16.mxu0 0
  %595 = vmatpush2.bf16.msra.mxu0 0
  %596 = vmatprep.subr.bf16.mxu0 0
  %597 = vmatpush2.bf16.msra.mxu0 0
  %598 = vmatprep.mubr.bf16.mxu0 0
  %599 = vmatmul.mubr.bf16.gmra.mxu0 %v444
  %v600 = vpop.f32.mrf.mxu0
  %v601 = vadd.f32 %v561, %v600
  %v602 = vpop.f32.mrf.mxu0
  %v603 = vpop.f32.mrf.mxu0
  %v604 = vpop.f32.mrf.mxu0
  %605 = vdwg.mxu0
  %606 = vmax.xlane.f32.xlu0 %v601
  %v607 = vpop.xlane.xlu0 %606
  %v608 = vsub.f32 %v601, %v607
  %v609 = vmul.f32 %v608, 1.442695
  %v610 = vpow.pop %v609
  %611 = vadd.xlane.f32.xlu0 %v610
  %v612 = vpop.xlane.xlu0 %611
  %v613 = vlog2.pop %v612
  %v614 = vmul.f32 %v613, 0.6931472
  %v615 = vadd.f32 %v607, %v614
  %v616 = vsub.f32 %v601, %v615
  %v617 = vpack.c.bf16 %v616, %v616
  %618 = vst [vmem:[%s3] sm:$0xf] %v617
  // Predicated region
  $region14: #{logreg_forward.1} parent=0 // pred_check
    _
  $region15: #{logreg_forward.1} parent=0 // pred_check_branch
    %620 = sbr.rel (0) target = $region17
  $region16: #{logreg_forward.1} parent=0 // pred_region
    _
  $region17: #{logreg_forward.1} parent=0 // pred_fallthru
    _
  // Predicated region
  $region18: #{logreg_forward.1} parent=0 // pred_check
    _
  $region19: #{logreg_forward.1} parent=0 // pred_check_branch
    %622 = sbr.rel (0) target = $region21
  $region20: #{logreg_forward.1} parent=0 // pred_region
    _
  $region21: #{logreg_forward.1} parent=0 // pred_fallthru
    _

</llo_original>
